<compile_context>
chip_gen: v7x
topology: tpu7x:2x2x1
jax: 0.10.0
libtpu: 0.0.40
codegen_flags: <defaults>
</compile_context>

<pallas_src>
import functools

import jax
import jax.numpy as jnp
from jax.experimental import pallas as pl
from jax.experimental.pallas import tpu as pltpu

LANE = 128  # vreg lane width on all TPU generations


def _round_up(n, m):
    return (n + m - 1) // m * m


def _mlp_kernel(x_ref, w1_ref, b1_ref, w2_ref, b2_ref, o_ref, *, activation):
    # FC1: [tb, in_dim] @ [in_dim, hidden_p] -> f32 accumulate, bias, activation.
    h = jnp.dot(x_ref[...], w1_ref[...], preferred_element_type=jnp.float32)
    h = h + b1_ref[...].astype(jnp.float32)
    if activation == "relu":
        h = jnp.maximum(h, 0.0)
    elif activation == "sigmoid":
        h = jax.nn.sigmoid(h)
    elif activation == "tanh":
        h = jnp.tanh(h)
    elif callable(activation):
        # TODO(synk): arbitrary callables must be jnp-traceable (no torch ops).
        h = activation(h)
    else:
        raise ValueError(f"unsupported activation: {activation}")
    # FC2: [tb, hidden_p] @ [hidden_p, tn] -> f32 accumulate, bias.
    # Note: bf16 weights downcast h to bf16 before the second MXU pass (standard
    # mixed precision; documented extra rounding vs a pure-f32 reference).
    o = jnp.dot(h.astype(w2_ref.dtype), w2_ref[...],
                preferred_element_type=jnp.float32)
    o = o + b2_ref[...].astype(jnp.float32)
    o_ref[...] = o.astype(o_ref.dtype)


def prepare_params(w1, b1, w2, b2):
    """Pad hidden (K) to a multiple of 128 ONCE (exact: padded W2 rows are 0).

    w1: [in_dim, hidden]  b1: [hidden]
    w2: [hidden, out_dim] b2: [out_dim]
    Returns (w1p [in_dim, hidden_p], b1p [1, hidden_p],
             w2p [hidden_p, out_dim], b2p [1, out_dim]).
    """
    in_dim, hidden = w1.shape
    out_dim = w2.shape[1]
    assert w2.shape[0] == hidden and b1.shape == (hidden,) and b2.shape == (out_dim,)
    hidden_p = _round_up(hidden, LANE)
    w1p = jnp.pad(w1, ((0, 0), (0, hidden_p - hidden)))
    b1p = jnp.pad(b1, (0, hidden_p - hidden)).reshape(1, hidden_p)
    w2p = jnp.pad(w2, ((0, hidden_p - hidden), (0, 0)))
    b2p = b2.reshape(1, out_dim)
    return w1p, b1p, w2p, b2p


@functools.partial(jax.jit, static_argnames=("activation", "block_b"))
def nonlinear_transforms_padded(x, w1p, b1p, w2p, b2p, *,
                                activation="relu", block_b=None):
    """Fused two-layer MLP forward on pre-padded params (see prepare_params).

    x: [B, in_dim]  ->  [B, out_dim] in x.dtype.
    """
    B, in_dim = x.shape
    hidden_p = w1p.shape[1]
    out_dim = w2p.shape[1]
    assert w1p.shape == (in_dim, hidden_p)
    assert w2p.shape == (hidden_p, out_dim)
    dtype = x.dtype
    itemsize = jnp.dtype(dtype).itemsize
    align = max(8, 32 // itemsize)           # sublane alignment: 8 f32 / 16 bf16

    # Physical (lane-rounded) widths only for VMEM accounting.
    in_phys = _round_up(in_dim, LANE)
    out_phys = _round_up(out_dim, LANE)

    # --- N (out_dim) tiling: only when W2 would be large in VMEM -------------
    if hidden_p * out_phys * itemsize <= (8 << 20):
        tn = out_dim                          # single N block, full-extent last dim
    else:
        tn = 512                              # multiple of 128; last block may be ragged
    nn = pl.cdiv(out_dim, tn)
    tn_phys = _round_up(tn, LANE)

    # --- batch tile: target ~2 MiB of x+o HBM traffic per grid step ----------
    if block_b is not None:
        tb = block_b
    else:
        tb = (2 << 20) // max(1, (in_dim + out_dim) * itemsize)
    tb = min(tb, _round_up(B, align))
    tb = max(align, _round_up(tb, align))
    # Keep >= 2 batch grid steps when B allows (feeds both v7x TensorCores).
    if B > 2 * align:
        tb = min(tb, _round_up(pl.cdiv(B, 2), align))

    # --- generation-aware VMEM budget (v7x: 64 MiB per TC) -------------------
    try:
        vmem_cap = int(pltpu.get_tpu_info().vmem_capacity_bytes)
    except Exception:
        vmem_cap = 64 << 20                   # conservative = safe on all chips
    budget = max(16 << 20, min(int(0.7 * vmem_cap), vmem_cap - (12 << 20)))

    weight_vmem = 2 * (in_phys * hidden_p + hidden_p
                       + hidden_p * tn_phys + tn_phys) * itemsize
    row_vmem = (2 * in_phys + 2 * tn_phys) * itemsize + 4 * (hidden_p + tn_phys)
    tb_vmem_cap = (budget - weight_vmem - (4 << 20)) // row_vmem
    if tb_vmem_cap >= align:
        tb = min(tb, (tb_vmem_cap // align) * align)
    # TODO(synk): extremely large hidden (K) would additionally need K-tiling
    # with an accumulator; not required for this module's hidden = out_dim // 4.

    grid = (pl.cdiv(B, tb), nn)               # ragged last batch tile allowed

    est = weight_vmem + tb * row_vmem
    vmem_limit = int(min(budget, max(est + (8 << 20), 32 << 20)))

    # --- cost hint: this kernel is bandwidth-bound, flops are tiny -----------
    flops = 2 * B * in_dim * hidden_p + 2 * B * hidden_p * out_dim
    trans = B * hidden_p if activation in ("sigmoid", "tanh") else 0
    bytes_acc = (B * (in_dim + out_dim)
                 + in_dim * hidden_p + hidden_p
                 + hidden_p * out_dim + out_dim) * itemsize
    cost = pl.CostEstimate(flops=flops, transcendentals=trans,
                           bytes_accessed=bytes_acc)

    kernel = functools.partial(_mlp_kernel, activation=activation)
    return pl.pallas_call(
        kernel,
        out_shape=jax.ShapeDtypeStruct((B, out_dim), dtype),
        grid_spec=pltpu.PrefetchScalarGridSpec(
            num_scalar_prefetch=0,
            grid=grid,
            in_specs=[
                pl.BlockSpec((tb, in_dim), lambda i, j: (i, 0)),        # x tile
                pl.BlockSpec((in_dim, hidden_p), lambda i, j: (0, 0)),  # W1
                pl.BlockSpec((1, hidden_p), lambda i, j: (0, 0)),       # b1
                pl.BlockSpec((hidden_p, tn), lambda i, j: (0, j)),      # W2 (N tile)
                pl.BlockSpec((1, tn), lambda i, j: (0, j)),             # b2 (N tile)
            ],
            out_specs=pl.BlockSpec((tb, tn), lambda i, j: (i, j)),
        ),
        compiler_params=pltpu.CompilerParams(
            dimension_semantics=("parallel", "parallel"),
            vmem_limit_bytes=vmem_limit,
        ),
        cost_estimate=cost,
    )(x, w1p, b1p, w2p, b2p)


def nonlinear_transforms(x, w1, b1, w2, b2, *, activation="relu", block_b=None):
    """Convenience wrapper taking raw (unpadded) params; pads per call.
    For repeated inference, call prepare_params() once and use
    nonlinear_transforms_padded() directly (keeps padding off the hot path)."""
    w1p, b1p, w2p, b2p = prepare_params(w1, b1, w2, b2)
    return nonlinear_transforms_padded(x, w1p, b1p, w2p, b2p,
                                       activation=activation, block_b=block_b)


def init_params(key, in_dim, out_dim, dtype=jnp.float32):
    """Deterministic init mimicking torch.nn.Linear's uniform(-1/sqrt(fan_in), ...)."""
    hidden = out_dim // 4
    k1, k2, k3, k4 = jax.random.split(key, 4)
    bound1 = 1.0 / jnp.sqrt(in_dim)
    bound2 = 1.0 / jnp.sqrt(hidden)
    w1 = jax.random.uniform(k1, (in_dim, hidden), dtype, -bound1, bound1)
    b1 = jax.random.uniform(k2, (hidden,), dtype, -bound1, bound1)
    w2 = jax.random.uniform(k3, (hidden, out_dim), dtype, -bound2, bound2)
    b2 = jax.random.uniform(k4, (out_dim,), dtype, -bound2, bound2)
    return w1, b1, w2, b2


def reference_relu(x, w1, b1, w2, b2):
    h = jnp.maximum(x @ w1 + b1, 0.0)
    return h @ w2 + b2


if __name__ == "__main__":
    key = jax.random.PRNGKey(0)
    kx, kp, kx2 = jax.random.split(key, 3)

    # Shapes consistent with the module: in_dim=32, out_dim=32 -> hidden=8.
    in_dim, out_dim = 32, 32
    w1, b1, w2, b2 = init_params(kp, in_dim, out_dim)

    # Padding hoisted: done once, reused across all calls below.
    params = prepare_params(w1, b1, w2, b2)
    params = tuple(jax.block_until_ready(p) for p in params)

    # Small f32 case (single tile, no padding anywhere).
    B = 8
    x = jax.random.normal(kx, (B, in_dim), dtype=jnp.float32)
    out = jax.block_until_ready(nonlinear_transforms_padded(x, *params))
    ref = reference_relu(x, w1, b1, w2, b2)
    assert out.shape == (B, out_dim)
    assert jnp.allclose(out, ref, atol=1e-5, rtol=1e-5), "f32 small (relu) mismatch"

    # Sigmoid activation: padded hidden lanes give sigmoid(0)=0.5 but multiply
    # zero-padded W2 rows -> exact.
    outs = jax.block_until_ready(
        nonlinear_transforms_padded(x, *params, activation="sigmoid"))
    refs = jax.nn.sigmoid(x @ w1 + b1) @ w2 + b2
    assert jnp.allclose(outs, refs, atol=1e-5, rtol=1e-5), "f32 sigmoid mismatch"

    # Larger f32 case with a ragged (non-tile-aligned) batch: exercises the
    # 2-step "parallel" batch grid and the partial last block (no x padding).
    B2 = 1000
    x2 = jax.random.normal(kx2, (B2, in_dim), dtype=jnp.float32)
    out2 = jax.block_until_ready(nonlinear_transforms_padded(x2, *params))
    ref2 = reference_relu(x2, w1, b1, w2, b2)
    assert out2.shape == (B2, out_dim)
    assert jnp.allclose(out2, ref2, atol=1e-4, rtol=1e-4), "f32 ragged-tiled mismatch"

    # bf16 I/O variant: halves HBM bytes (bandwidth win on v5e/v6e/v7x alike);
    # MXU still accumulates in f32.
    xb = x2.astype(jnp.bfloat16)
    params_bf16 = tuple(p.astype(jnp.bfloat16) for p in params)
    outb = jax.block_until_ready(nonlinear_transforms_padded(xb, *params_bf16))
    assert outb.shape == (B2, out_dim)
    assert jnp.allclose(outb.astype(jnp.float32), ref2,
                        atol=5e-2, rtol=5e-2), "bf16 mismatch"

    # Convenience (unpadded-params) wrapper sanity check.
    outc = jax.block_until_ready(nonlinear_transforms(x, w1, b1, w2, b2))
    assert jnp.allclose(outc, ref, atol=1e-5, rtol=1e-5), "wrapper mismatch"

    print("KERNEL_OK")
</pallas_src>

<mosaic_0001>
module attributes {stable_mosaic.version = 11 : i64} {
  func.func @_mlp_kernel(%arg0: i32, %arg1: i32, %arg2: memref<8x32xf32, #tpu.memory_space<vmem>>, %arg3: memref<32x128xf32, #tpu.memory_space<vmem>>, %arg4: memref<1x128xf32, #tpu.memory_space<vmem>>, %arg5: memref<128x32xf32, #tpu.memory_space<vmem>>, %arg6: memref<1x32xf32, #tpu.memory_space<vmem>>, %arg7: memref<8x32xf32, #tpu.memory_space<vmem>>) attributes {dimension_semantics = [#tpu.dimension_semantics<parallel>, #tpu.dimension_semantics<parallel>], iteration_bounds = array<i64: 1, 1>, scalar_prefetch = 0 : i64, scratch_operands = 0 : i64, tpu.core_type = #tpu.core_type<tc>, window_params = [{transform_indices = @transform_0, window_bounds = array<i64: 8, 32>}, {pipeline_mode = #tpu.pipeline_mode<synchronous>, transform_indices = @transform_1, window_bounds = array<i64: 32, 128>}, {pipeline_mode = #tpu.pipeline_mode<synchronous>, transform_indices = @transform_2, window_bounds = array<i64: 1, 128>}, {transform_indices = @transform_3, window_bounds = array<i64: 128, 32>}, {transform_indices = @transform_4, window_bounds = array<i64: 1, 32>}, {transform_indices = @transform_5, window_bounds = array<i64: 8, 32>}]} {
    %c0 = arith.constant 0 : index
    %c0_0 = arith.constant 0 : index
    %0 = vector.load %arg2[%c0, %c0_0] : memref<8x32xf32, #tpu.memory_space<vmem>>, vector<8x32xf32>
    %c0_1 = arith.constant 0 : index
    %c0_2 = arith.constant 0 : index
    %1 = vector.load %arg3[%c0_1, %c0_2] : memref<32x128xf32, #tpu.memory_space<vmem>>, vector<32x128xf32>
    %cst = arith.constant dense<0.000000e+00> : vector<8x128xf32>
    %2 = tpu.matmul %0, %1, %cst {dimension_numbers = #tpu.dot_dimension_numbers<[1], [0], [0], [1], [0, 0, 1, 1], [], []>} : vector<8x32xf32>, vector<32x128xf32>, vector<8x128xf32> -> vector<8x128xf32>
    %c0_3 = arith.constant 0 : index
    %c0_4 = arith.constant 0 : index
    %3 = vector.load %arg4[%c0_3, %c0_4] : memref<1x128xf32, #tpu.memory_space<vmem>>, vector<1x128xf32>
    %4 = vector.broadcast %3 : vector<1x128xf32> to vector<8x128xf32>
    %5 = arith.addf %2, %4 : vector<8x128xf32>
    %cst_5 = arith.constant 0.000000e+00 : f32
    %6 = vector.broadcast %cst_5 : f32 to vector<8x128xf32>
    %7 = arith.maximumf %5, %6 : vector<8x128xf32>
    %c0_6 = arith.constant 0 : index
    %c0_7 = arith.constant 0 : index
    %8 = vector.load %arg5[%c0_6, %c0_7] : memref<128x32xf32, #tpu.memory_space<vmem>>, vector<128x32xf32>
    %cst_8 = arith.constant dense<0.000000e+00> : vector<8x32xf32>
    %9 = tpu.matmul %7, %8, %cst_8 {dimension_numbers = #tpu.dot_dimension_numbers<[1], [0], [0], [1], [0, 0, 1, 1], [], []>} : vector<8x128xf32>, vector<128x32xf32>, vector<8x32xf32> -> vector<8x32xf32>
    %c0_9 = arith.constant 0 : index
    %c0_10 = arith.constant 0 : index
    %10 = vector.load %arg6[%c0_9, %c0_10] : memref<1x32xf32, #tpu.memory_space<vmem>>, vector<1x32xf32>
    %11 = vector.broadcast %10 : vector<1x32xf32> to vector<8x32xf32>
    %12 = arith.addf %9, %11 : vector<8x32xf32>
    %c0_11 = arith.constant 0 : index
    %c0_12 = arith.constant 0 : index
    %13 = vector.load %arg7[%c0_11, %c0_12] : memref<8x32xf32, #tpu.memory_space<vmem>>, vector<8x32xf32>
    tpu.vector_store %arg7[%c0_11, %c0_12], %12 {strides = array<i32>} : memref<8x32xf32, #tpu.memory_space<vmem>>, vector<8x32xf32>,
    return
  }
  func.func @transform_0(%arg0: i32, %arg1: i32) -> (i32, i32) {
    %c0_i32 = arith.constant 0 : i32
    %c0_i32_0 = arith.constant 0 : i32
    return %arg0, %c0_i32 : i32, i32
  }
  func.func @transform_1(%arg0: i32, %arg1: i32) -> (i32, i32) {
    %c0_i32 = arith.constant 0 : i32
    %c0_i32_0 = arith.constant 0 : i32
    %c0_i32_1 = arith.constant 0 : i32
    return %c0_i32, %c0_i32_0 : i32, i32
  }
  func.func @transform_2(%arg0: i32, %arg1: i32) -> (i32, i32) {
    %c0_i32 = arith.constant 0 : i32
    %c0_i32_0 = arith.constant 0 : i32
    %c0_i32_1 = arith.constant 0 : i32
    return %c0_i32, %c0_i32_0 : i32, i32
  }
  func.func @transform_3(%arg0: i32, %arg1: i32) -> (i32, i32) {
    %c0_i32 = arith.constant 0 : i32
    %c0_i32_0 = arith.constant 0 : i32
    return %c0_i32, %arg1 : i32, i32
  }
  func.func @transform_4(%arg0: i32, %arg1: i32) -> (i32, i32) {
    %c0_i32 = arith.constant 0 : i32
    %c0_i32_0 = arith.constant 0 : i32
    return %c0_i32, %arg1 : i32, i32
  }
  func.func @transform_5(%arg0: i32, %arg1: i32) -> (i32, i32) {
    %c0_i32 = arith.constant 0 : i32
    return %arg0, %arg1 : i32, i32
  }
}

</mosaic_0001>

<llo_original>
// kernel: nonlinear_transforms_padded.1
$region0: #{nonlinear_transforms_padded.1}
  #allocation0 [shape = 'u32[]', space=smem, size = 0x4, offset = 0x4, fixed_abs, tag = 'smem constant byte address 0x4 - core index']
  #allocation1 [shape = 'u32[144,128]{1,0:T(1,128)}', space=vmem, size = 0x12000, scoped, tag = 'internal scratch']
  %s0 = inlined_call_operand.vmem [shape: f32[8,32], index: 0, kind: input, shape index: {}]
  %s1 = inlined_call_operand.vmem [shape: f32[32,128], index: 1, kind: input, shape index: {}]
  %s2 = inlined_call_operand.vmem [shape: f32[1,128], index: 2, kind: input, shape index: {}]
  %s3 = inlined_call_operand.vmem [shape: f32[128,32], index: 3, kind: input, shape index: {}]
  %s4 = inlined_call_operand.vmem [shape: f32[1,32], index: 4, kind: input, shape index: {}]
  %s5 = inlined_call_operand.hbm [shape: f32[8,32], index: 5, kind: output, shape index: {}]
  %s6 = sld [smem:[#allocation0]]
  $region30: #{nonlinear_transforms_padded.1} parent=0
    _
  %s8 = ssub.s32 1, %s6
  %s9 = scalar_select 0, %s8, %s6
  $region1: #{nonlinear_transforms_padded.1} parent=0
    #allocation2 [shape = 'u8[4096]{0}', space=vmem, size = 0x1000, scoped, tag = 'output window, operand 0, single buffered']
    #allocation3 [shape = 's32[1]{0}', space=sflag, size = 0x4, scoped, tag = 'scoped memory for nonlinear_transforms_padded.1']
    %10 = vsyncpa [#allocation3], 0
    // Predicated region
    $region2: #{nonlinear_transforms_padded.1} parent=1 // pred_check
      _
    $region3: #{nonlinear_transforms_padded.1} parent=1 // pred_check_branch
      %12 = sbr.rel (0) target = $region5
    $region4: #{nonlinear_transforms_padded.1} parent=1 // pred_region
      _
    $region5: #{nonlinear_transforms_padded.1} parent=1 // pred_fallthru
      _
    // Predicated region
    $region6: #{nonlinear_transforms_padded.1} parent=1 // pred_check
      _
    $region7: #{nonlinear_transforms_padded.1} parent=1 // pred_check_branch
      %14 = sbr.rel (0) target = $region9
    $region8: #{nonlinear_transforms_padded.1} parent=1 // pred_region
      _
    $region9: #{nonlinear_transforms_padded.1} parent=1 // pred_fallthru
      _
    // Predicated region
    $region10: #{nonlinear_transforms_padded.1} parent=1 // pred_check
      _
    $region11: #{nonlinear_transforms_padded.1} parent=1 // pred_check_branch
      %16 = sbr.rel (0) target = $region13
    $region12: #{nonlinear_transforms_padded.1} parent=1 // pred_region
      _
    $region13: #{nonlinear_transforms_padded.1} parent=1 // pred_fallthru
      _
    // Predicated region
    $region14: #{nonlinear_transforms_padded.1} parent=1 // pred_check
      _
    $region15: #{nonlinear_transforms_padded.1} parent=1 // pred_check_branch
      %18 = sbr.rel (0) target = $region17
    $region16: #{nonlinear_transforms_padded.1} parent=1 // pred_region
      _
    $region17: #{nonlinear_transforms_padded.1} parent=1 // pred_fallthru
      _
    // Predicated region
    $region18: #{nonlinear_transforms_padded.1} parent=1 // pred_check
      _
    $region19: #{nonlinear_transforms_padded.1} parent=1 // pred_check_branch
      %20 = sbr.rel (0) target = $region21
    $region20: #{nonlinear_transforms_padded.1} parent=1 // pred_region
      _
    $region21: #{nonlinear_transforms_padded.1} parent=1 // pred_fallthru
      _
    %v21 = vld [vmem:[%s0] sm:$0xff]
    %v22 = vld [vmem:[%s1] sm:$0xff]
    %v23 = vld [vmem:[%s1 + $0x8] sm:$0xff]
    %v24 = vld [vmem:[%s1 + $0x10] sm:$0xff]
    %v25 = vld [vmem:[%s1 + $0x18] sm:$0xff]
    %v26 = vld [vmem:[%s2] sm:$0x1]
    %v28 = vlaneseq
    %v29 = vshrl.u32 %v28, 7
    %v30 = vsub.s32 0, %v29
    %v31 = vrot.slane %v26, %v30
    %vm33 = vcmask 261120
    %v35 = vsel %vm33, %v21, 0
    %37 = vmatprep.subr.mxu0 0.0
    %38 = vmatpush1.msra.mxu0 %v22
    %39 = vmatprep.subr.mxu0 0.0
    %40 = vmatpush1.msra.mxu0 %v23
    %41 = vmatprep.subr.mxu0 0.0
    %42 = vmatpush1.msra.mxu0 %v24
    %43 = vmatprep.subr.mxu0 0.0
    %44 = vmatpush1.msra.mxu0 %v25
    %45 = vmatprep.subr.mxu0 0.0
    %46 = vmatpush1.msra.mxu0 0.0
    %47 = vmatprep.subr.mxu0 0.0
    %48 = vmatpush1.msra.mxu0 0.0
    %49 = vmatprep.subr.mxu0 0.0
    %50 = vmatpush1.msra.mxu0 0.0
    %51 = vmatprep.subr.mxu0 0.0
    %52 = vmatpush1.msra.mxu0 0.0
    %53 = vmatprep.subr.mxu0 0.0
    %54 = vmatpush1.msra.mxu0 0.0
    %55 = vmatprep.subr.mxu0 0.0
    %56 = vmatpush1.msra.mxu0 0.0
    %57 = vmatprep.subr.mxu0 0.0
    %58 = vmatpush1.msra.mxu0 0.0
    %59 = vmatprep.subr.mxu0 0.0
    %60 = vmatpush1.msra.mxu0 0.0
    %61 = vmatprep.subr.mxu0 0.0
    %62 = vmatpush1.msra.mxu0 0.0
    %63 = vmatprep.subr.mxu0 0.0
    %64 = vmatpush1.msra.mxu0 0.0
    %65 = vmatprep.subr.mxu0 0.0
    %66 = vmatpush1.msra.mxu0 0.0
    %67 = vmatprep.subr.mxu0 0.0
    %68 = vmatpush1.msra.mxu0 0.0
    %69 = vmatprep.subr.mxu0 0.0
    %70 = vmatpush1.msra.mxu0 0.0
    %71 = vmatprep.subr.mxu0 0.0
    %72 = vmatpush1.msra.mxu0 0.0
    %73 = vmatprep.subr.mxu0 0.0
    %74 = vmatpush1.msra.mxu0 0.0
    %75 = vmatprep.subr.mxu0 0.0
    %76 = vmatpush1.msra.mxu0 0.0
    %77 = vmatprep.subr.mxu0 0.0
    %78 = vmatpush1.msra.mxu0 0.0
    %79 = vmatprep.subr.mxu0 0.0
    %80 = vmatpush1.msra.mxu0 0.0
    %81 = vmatprep.subr.mxu0 0.0
    %82 = vmatpush1.msra.mxu0 0.0
    %83 = vmatprep.subr.mxu0 0.0
    %84 = vmatpush1.msra.mxu0 0.0
    %85 = vmatprep.subr.mxu0 0.0
    %86 = vmatpush1.msra.mxu0 0.0
    %87 = vmatprep.subr.mxu0 0.0
    %88 = vmatpush1.msra.mxu0 0.0
    %89 = vmatprep.subr.mxu0 0.0
    %90 = vmatpush1.msra.mxu0 0.0
    %91 = vmatprep.subr.mxu0 0.0
    %92 = vmatpush1.msra.mxu0 0.0
    %93 = vmatprep.subr.mxu0 0.0
    %94 = vmatpush1.msra.mxu0 0.0
    %95 = vmatprep.subr.mxu0 0.0
    %96 = vmatpush1.msra.mxu0 0.0
    %97 = vmatprep.subr.mxu0 0.0
    %98 = vmatpush1.msra.mxu0 0.0
    %99 = vmatprep.subr.mxu0 0.0
    %100 = vmatpush1.msra.mxu0 0.0
    %101 = vmatprep.mubr.f32.mxu0 0.0
    %102 = vmatmul.mubr.f32.gmra.mrb[0].mxu0 %v35
    %v103 = vpop.f32.mrb[0].mxu0
    %v104 = vadd.f32 %v31, %v103
    %v105 = vpop.f32.mrb[0].mxu0
    %106 = vdwg.mxu0
    %v107 = vmax.f32 %v104, 0.0
    %v108 = vld [vmem:[%s3] sm:$0xff]
    %v109 = vld [vmem:[%s3 + $0x8] sm:$0xff]
    %v110 = vld [vmem:[%s3 + $0x10] sm:$0xff]
    %v111 = vld [vmem:[%s3 + $0x18] sm:$0xff]
    %v112 = vld [vmem:[%s3 + $0x20] sm:$0xff]
    %v113 = vld [vmem:[%s3 + $0x28] sm:$0xff]
    %v114 = vld [vmem:[%s3 + $0x30] sm:$0xff]
    %v115 = vld [vmem:[%s3 + $0x38] sm:$0xff]
    %v116 = vld [vmem:[%s3 + $0x40] sm:$0xff]
    %v117 = vld [vmem:[%s3 + $0x48] sm:$0xff]
    %v118 = vld [vmem:[%s3 + $0x50] sm:$0xff]
    %v119 = vld [vmem:[%s3 + $0x58] sm:$0xff]
    %v120 = vld [vmem:[%s3 + $0x60] sm:$0xff]
    %v121 = vld [vmem:[%s3 + $0x68] sm:$0xff]
    %v122 = vld [vmem:[%s3 + $0x70] sm:$0xff]
    %v123 = vld [vmem:[%s3 + $0x78] sm:$0xff]
    %v124 = vld [vmem:[%s4] sm:$0x1]
    %v126 = vlaneseq
    %v127 = vshrl.u32 %v126, 7
    %v128 = vsub.s32 0, %v127
    %v129 = vrot.slane %v124, %v128
    %131 = vmatprep.subr.mxu0 0.0
    %132 = vmatpush1.msra.mxu0 %v108
    %133 = vmatprep.subr.mxu0 0.0
    %134 = vmatpush1.msra.mxu0 %v109
    %135 = vmatprep.subr.mxu0 0.0
    %136 = vmatpush1.msra.mxu0 %v110
    %137 = vmatprep.subr.mxu0 0.0
    %138 = vmatpush1.msra.mxu0 %v111
    %139 = vmatprep.subr.mxu0 0.0
    %140 = vmatpush1.msra.mxu0 %v112
    %141 = vmatprep.subr.mxu0 0.0
    %142 = vmatpush1.msra.mxu0 %v113
    %143 = vmatprep.subr.mxu0 0.0
    %144 = vmatpush1.msra.mxu0 %v114
    %145 = vmatprep.subr.mxu0 0.0
    %146 = vmatpush1.msra.mxu0 %v115
    %147 = vmatprep.subr.mxu0 0.0
    %148 = vmatpush1.msra.mxu0 %v116
    %149 = vmatprep.subr.mxu0 0.0
    %150 = vmatpush1.msra.mxu0 %v117
    %151 = vmatprep.subr.mxu0 0.0
    %152 = vmatpush1.msra.mxu0 %v118
    %153 = vmatprep.subr.mxu0 0.0
    %154 = vmatpush1.msra.mxu0 %v119
    %155 = vmatprep.subr.mxu0 0.0
    %156 = vmatpush1.msra.mxu0 %v120
    %157 = vmatprep.subr.mxu0 0.0
    %158 = vmatpush1.msra.mxu0 %v121
    %159 = vmatprep.subr.mxu0 0.0
    %160 = vmatpush1.msra.mxu0 %v122
    %161 = vmatprep.subr.mxu0 0.0
    %162 = vmatpush1.msra.mxu0 %v123
    %163 = vmatprep.subr.mxu0 0.0
    %164 = vmatpush1.msra.mxu0 0.0
    %165 = vmatprep.subr.mxu0 0.0
    %166 = vmatpush1.msra.mxu0 0.0
    %167 = vmatprep.subr.mxu0 0.0
    %168 = vmatpush1.msra.mxu0 0.0
    %169 = vmatprep.subr.mxu0 0.0
    %170 = vmatpush1.msra.mxu0 0.0
    %171 = vmatprep.subr.mxu0 0.0
    %172 = vmatpush1.msra.mxu0 0.0
    %173 = vmatprep.subr.mxu0 0.0
    %174 = vmatpush1.msra.mxu0 0.0
    %175 = vmatprep.subr.mxu0 0.0
    %176 = vmatpush1.msra.mxu0 0.0
    %177 = vmatprep.subr.mxu0 0.0
    %178 = vmatpush1.msra.mxu0 0.0
    %179 = vmatprep.subr.mxu0 0.0
    %180 = vmatpush1.msra.mxu0 0.0
    %181 = vmatprep.subr.mxu0 0.0
    %182 = vmatpush1.msra.mxu0 0.0
    %183 = vmatprep.subr.mxu0 0.0
    %184 = vmatpush1.msra.mxu0 0.0
    %185 = vmatprep.subr.mxu0 0.0
    %186 = vmatpush1.msra.mxu0 0.0
    %187 = vmatprep.subr.mxu0 0.0
    %188 = vmatpush1.msra.mxu0 0.0
    %189 = vmatprep.subr.mxu0 0.0
    %190 = vmatpush1.msra.mxu0 0.0
    %191 = vmatprep.subr.mxu0 0.0
    %192 = vmatpush1.msra.mxu0 0.0
    %193 = vmatprep.subr.mxu0 0.0
    %194 = vmatpush1.msra.mxu0 0.0
    %195 = vmatprep.mubr.f32.mxu0 0.0
    %196 = vmatmul.mubr.f32.gmra.mrb[0].mxu0 %v107
    %v197 = vpop.f32.mrb[0].mxu0
    %v198 = vadd.f32 %v129, %v197
    %v199 = vpop.f32.mrb[0].mxu0
    %200 = vdwg.mxu0
    %201 = vst.msk [vmem:[#allocation2] sm:$0xff] %vm33, %v198
    // Predicated region
    $region22: #{nonlinear_transforms_padded.1} parent=1 // pred_check
      _
    $region23: #{nonlinear_transforms_padded.1} parent=1 // pred_check_branch
      %203 = sbr.rel (0) target = $region25
    $region24: #{nonlinear_transforms_padded.1} parent=1 // pred_region
      %s205 = ssub.s32 128, 128
      %206 = vsyncadd [#allocation3], %s205
      %s208 = sshll.u32 [#allocation2], 4
      %s209 = int_to_ptr.vmem [resolvable:$true] %s208
      %211 = dma.vmem_to_hbm [thread:$0]  %s209, 128, %s5, [#allocation3]
    $region25: #{nonlinear_transforms_padded.1} parent=1 // pred_fallthru
      _
    // Predicated region
    $region26: #{nonlinear_transforms_padded.1} parent=1 // pred_check
      _
    $region27: #{nonlinear_transforms_padded.1} parent=1 // pred_check_branch
      %213 = sbr.rel (0) target = $region29
    $region28: #{nonlinear_transforms_padded.1} parent=1 // pred_region
      %214 = dma.done [#allocation3], 128
    $region29: #{nonlinear_transforms_padded.1} parent=1 // pred_fallthru
      _
    %215 = vsyncpa [#allocation3], 1

</llo_original>
